<compile_context>
chip_gen: v7x
topology: tpu7x:2x2x1
jax: 0.10.0
libtpu: 0.0.40
codegen_flags: <defaults>
</compile_context>

<pallas_src>
import jax
import jax.numpy as jnp
from jax.experimental import pallas as pl
from jax.experimental.pallas import tpu as pltpu

N_EMBED = 128      # matches `n_embed = 128` in the module
HEAD_SIZE = 16     # matches `head_size = 16`
BLOCK_SIZE = 32    # causal-mask buffer size; T must be <= BLOCK_SIZE
BATCH = 2
SEQ = 8            # T (multiple of 8 for clean sublane tiling)


def _head_kernel(x_ref, wqkv_ref, o_ref):
    # x_ref: (Bt, T, C), wqkv_ref: (C, 3*H), o_ref: (Bt, T, H)
    x = x_ref[...]                                 # (Bt, T, C)
    bt, t, c = x.shape
    h = o_ref.shape[-1]

    # Fused q/k/v projection as ONE (Bt*T, C) @ (C, 3H) GEMM.
    # The C**-0.5 scale is already folded into the query columns of wqkv.
    x2d = x.reshape(bt * t, c)
    qkv = jnp.dot(x2d, wqkv_ref[...],
                  preferred_element_type=jnp.float32).reshape(bt, t, 3 * h)
    q = qkv[:, :, :h]          # scale already applied via the fused weight
    k = qkv[:, :, h:2 * h]
    v = qkv[:, :, 2 * h:]

    # wei = q @ k^T  (batched over Bt; contraction over the head dim).
    scores = jnp.einsum('btd,bsd->bts', q, k,
                        preferred_element_type=jnp.float32)   # (Bt, T, T)

    # Causal mask (tril): keep col <= row, else -inf (diagonal always kept,
    # so every softmax row has at least one finite entry).
    row = jax.lax.broadcasted_iota(jnp.int32, (t, t), 0)
    col = jax.lax.broadcasted_iota(jnp.int32, (t, t), 1)
    scores = jnp.where((col <= row)[None, :, :], scores, -jnp.inf)

    # Softmax over the key axis.
    m = jnp.max(scores, axis=-1, keepdims=True)
    e = jnp.exp(scores - m)
    probs = e / jnp.sum(e, axis=-1, keepdims=True)

    # TODO(synk): nn.Dropout(0.1) on the attention weights uses torch's global
    # RNG in training mode; the kernel implements eval-mode (identity).

    # out = wei @ v ; single full-tile store.
    out = jnp.einsum('bts,bsd->btd', probs, v,
                     preferred_element_type=jnp.float32)
    o_ref[...] = out.astype(o_ref.dtype)


def fuse_head_weights(w_query, w_key, w_value, n_embed):
    """One-time parameter setup: fuse q/k/v weights and fold in C**-0.5.

    w_*: (n_embed, head_size) == nn.Linear weight^T. Returns (n_embed, 3*H).
    Order is (q, k, v) with the attention scale folded into the q columns.
    """
    scale = float(n_embed) ** -0.5
    return jnp.concatenate([w_query * scale, w_key, w_value], axis=1)


def _pick_batch_tile(B, T, C, vmem_budget_bytes=8 * 1024 * 1024):
    """Pick Bt: as many batch rows per step as fit a conservative VMEM budget
    (double-buffered x tile), and dividing B so there is no ragged tile."""
    per_row_bytes = T * C * 4 * 2          # f32, x2 for double buffering
    bt = max(1, min(B, vmem_budget_bytes // per_row_bytes))
    while B % bt != 0:
        bt -= 1
    return bt


def head_attention(x, wqkv):
    """x: (B, T, n_embed); wqkv: (n_embed, 3*head_size) from fuse_head_weights.

    Returns out: (B, T, head_size) float32 (eval-mode forward of `Head`).
    """
    B, T, C = x.shape
    H = wqkv.shape[1] // 3
    assert T <= BLOCK_SIZE and T % 8 == 0

    Bt = _pick_batch_tile(B, T, C)
    num_steps = B // Bt

    # Megacore split only pays off once each core gets real work; for a
    # single-step (toy) problem keep it on one core.
    semantics = ("parallel",) if num_steps > 1 else ("arbitrary",)

    out = pl.pallas_call(
        _head_kernel,
        out_shape=jax.ShapeDtypeStruct((B, T, H), jnp.float32),
        grid=(num_steps,),
        in_specs=[
            pl.BlockSpec((Bt, T, C), lambda b: (b, 0, 0)),   # packed batch slab
            pl.BlockSpec((C, 3 * H), lambda b: (0, 0)),      # resident fused weight
        ],
        out_specs=pl.BlockSpec((Bt, T, H), lambda b: (b, 0, 0)),
        compiler_params=pltpu.CompilerParams(dimension_semantics=semantics),
    )(x, wqkv)
    return out


def _reference(x, w_query, w_key, w_value):
    B, T, C = x.shape
    q = x @ w_query
    k = x @ w_key
    v = x @ w_value
    wei = jnp.einsum('btd,bsd->bts', q, k) * (C ** -0.5)
    mask = jnp.tril(jnp.ones((T, T), dtype=bool))
    wei = jnp.where(mask, wei, -jnp.inf)
    wei = jax.nn.softmax(wei, axis=-1)
    return jnp.einsum('bts,bsd->btd', wei, v)


if __name__ == "__main__":
    key = jax.random.PRNGKey(0)
    kx, kq, kk, kv = jax.random.split(key, 4)

    x = jax.random.normal(kx, (BATCH, SEQ, N_EMBED), jnp.float32)

    # nn.Linear-style deterministic init (uniform in +-1/sqrt(fan_in)), stored as W^T.
    bound = 1.0 / (N_EMBED ** 0.5)
    w_query = jax.random.uniform(kq, (N_EMBED, HEAD_SIZE), jnp.float32, -bound, bound)
    w_key = jax.random.uniform(kk, (N_EMBED, HEAD_SIZE), jnp.float32, -bound, bound)
    w_value = jax.random.uniform(kv, (N_EMBED, HEAD_SIZE), jnp.float32, -bound, bound)

    # One-time parameter setup (hoisted out of the per-forward path).
    wqkv = fuse_head_weights(w_query, w_key, w_value, N_EMBED)

    out = head_attention(x, wqkv)
    jax.block_until_ready(out)

    ref = _reference(x, w_query, w_key, w_value)
    assert out.shape == (BATCH, SEQ, HEAD_SIZE) and out.dtype == jnp.float32
    assert jnp.allclose(out, ref, atol=1e-5, rtol=1e-5)

    print("KERNEL_OK")
</pallas_src>

<mosaic_0001>
module attributes {stable_mosaic.version = 11 : i64} {
  func.func @_head_kernel(%arg0: i32, %arg1: memref<2x8x128xf32, #tpu.memory_space<vmem>>, %arg2: memref<128x48xf32, #tpu.memory_space<vmem>>, %arg3: memref<2x8x16xf32, #tpu.memory_space<vmem>>) attributes {dimension_semantics = [#tpu.dimension_semantics<arbitrary>], iteration_bounds = array<i64: 1>, scalar_prefetch = 0 : i64, scratch_operands = 0 : i64, tpu.core_type = #tpu.core_type<tc>, window_params = [{transform_indices = @transform_0, window_bounds = array<i64: 2, 8, 128>}, {pipeline_mode = #tpu.pipeline_mode<synchronous>, transform_indices = @transform_1, window_bounds = array<i64: 128, 48>}, {transform_indices = @transform_2, window_bounds = array<i64: 2, 8, 16>}]} {
    %c0 = arith.constant 0 : index
    %c0_0 = arith.constant 0 : index
    %c0_1 = arith.constant 0 : index
    %0 = vector.load %arg1[%c0, %c0_0, %c0_1] : memref<2x8x128xf32, #tpu.memory_space<vmem>>, vector<2x8x128xf32>
    %1 = vector.shape_cast %0 : vector<2x8x128xf32> to vector<16x128xf32>
    %c0_2 = arith.constant 0 : index
    %c0_3 = arith.constant 0 : index
    %2 = vector.load %arg2[%c0_2, %c0_3] : memref<128x48xf32, #tpu.memory_space<vmem>>, vector<128x48xf32>
    %cst = arith.constant dense<0.000000e+00> : vector<16x48xf32>
    %3 = tpu.matmul %1, %2, %cst {dimension_numbers = #tpu.dot_dimension_numbers<[1], [0], [0], [1], [0, 0, 1, 1], [], []>} : vector<16x128xf32>, vector<128x48xf32>, vector<16x48xf32> -> vector<16x48xf32>
    %4 = vector.shape_cast %3 : vector<16x48xf32> to vector<2x8x48xf32>
    %5 = vector.extract_strided_slice %4 {offsets = [0, 0, 0], sizes = [2, 8, 16], strides = [1, 1, 1]} : vector<2x8x48xf32> to vector<2x8x16xf32>
    %6 = vector.extract_strided_slice %4 {offsets = [0, 0, 16], sizes = [2, 8, 16], strides = [1, 1, 1]} : vector<2x8x48xf32> to vector<2x8x16xf32>
    %7 = vector.extract_strided_slice %4 {offsets = [0, 0, 32], sizes = [2, 8, 16], strides = [1, 1, 1]} : vector<2x8x48xf32> to vector<2x8x16xf32>
    "tpu.trace_start"() <{level = 10 : i32, message = "btd,bsd->bts"}> : () -> ()
    %cst_4 = arith.constant dense<0.000000e+00> : vector<2x8x8xf32>
    %8 = tpu.matmul %5, %6, %cst_4 {dimension_numbers = #tpu.dot_dimension_numbers<[2], [2], [1], [1], [0, 0, 0, 1, 1, 1], [0], [0]>} : vector<2x8x16xf32>, vector<2x8x16xf32>, vector<2x8x8xf32> -> vector<2x8x8xf32>
    "tpu.trace_stop"() : () -> ()
    %9 = tpu.iota {dimensions = array<i32: 0>} : vector<8x8xi32>
    %10 = tpu.iota {dimensions = array<i32: 1>} : vector<8x8xi32>
    %11 = arith.cmpi sle, %10, %9 : vector<8x8xi32>
    %12 = vector.shape_cast %11 : vector<8x8xi1> to vector<1x8x8xi1>
    %cst_5 = arith.constant 0xFF800000 : f32
    %13 = vector.shape_cast %12 : vector<1x8x8xi1> to vector<1x8x8xi1>
    %14 = vector.broadcast %13 : vector<1x8x8xi1> to vector<2x8x8xi1>
    %15 = vector.broadcast %cst_5 : f32 to vector<2x8x8xf32>
    %16 = arith.select %14, %8, %15 : vector<2x8x8xi1>, vector<2x8x8xf32>
    %cst_6 = arith.constant dense<0xFF800000> : vector<2x8xf32>
    %17 = vector.multi_reduction <maximumf>, %16, %cst_6 [2] : vector<2x8x8xf32> to vector<2x8xf32>
    %18 = vector.shape_cast %17 : vector<2x8xf32> to vector<2x8x1xf32>
    %19 = vector.broadcast %18 : vector<2x8x1xf32> to vector<2x8x8xf32>
    %20 = arith.subf %16, %19 : vector<2x8x8xf32>
    %21 = math.exp %20 : vector<2x8x8xf32>
    %cst_7 = arith.constant dense<0.000000e+00> : vector<2x8xf32>
    %22 = vector.multi_reduction <add>, %21, %cst_7 [2] : vector<2x8x8xf32> to vector<2x8xf32>
    %23 = vector.shape_cast %22 : vector<2x8xf32> to vector<2x8x1xf32>
    %24 = vector.broadcast %23 : vector<2x8x1xf32> to vector<2x8x8xf32>
    %25 = arith.divf %21, %24 : vector<2x8x8xf32>
    "tpu.trace_start"() <{level = 10 : i32, message = "bts,bsd->btd"}> : () -> ()
    %cst_8 = arith.constant dense<0.000000e+00> : vector<2x8x16xf32>
    %26 = tpu.matmul %25, %7, %cst_8 {dimension_numbers = #tpu.dot_dimension_numbers<[2], [1], [1], [2], [0, 0, 0, 1, 1, 2], [0], [0]>} : vector<2x8x8xf32>, vector<2x8x16xf32>, vector<2x8x16xf32> -> vector<2x8x16xf32>
    "tpu.trace_stop"() : () -> ()
    %c0_9 = arith.constant 0 : index
    %c0_10 = arith.constant 0 : index
    %c0_11 = arith.constant 0 : index
    %27 = vector.load %arg3[%c0_9, %c0_10, %c0_11] : memref<2x8x16xf32, #tpu.memory_space<vmem>>, vector<2x8x16xf32>
    tpu.vector_store %arg3[%c0_9, %c0_10, %c0_11], %26 {strides = array<i32>} : memref<2x8x16xf32, #tpu.memory_space<vmem>>, vector<2x8x16xf32>,
    return
  }
  func.func @transform_0(%arg0: i32) -> (i32, i32, i32) {
    %c0_i32 = arith.constant 0 : i32
    %c0_i32_0 = arith.constant 0 : i32
    %c0_i32_1 = arith.constant 0 : i32
    return %arg0, %c0_i32, %c0_i32_0 : i32, i32, i32
  }
  func.func @transform_1(%arg0: i32) -> (i32, i32) {
    %c0_i32 = arith.constant 0 : i32
    %c0_i32_0 = arith.constant 0 : i32
    %c0_i32_1 = arith.constant 0 : i32
    return %c0_i32, %c0_i32_0 : i32, i32
  }
  func.func @transform_2(%arg0: i32) -> (i32, i32, i32) {
    %c0_i32 = arith.constant 0 : i32
    %c0_i32_0 = arith.constant 0 : i32
    %c0_i32_1 = arith.constant 0 : i32
    return %arg0, %c0_i32, %c0_i32_0 : i32, i32, i32
  }
}

</mosaic_0001>

<llo_original>
// kernel: tpu_custom_call.1
$region0: #{tpu_custom_call.1}
  #allocation0 [shape = 'u32[]', space=smem, size = 0x4, offset = 0x4, fixed_abs, tag = 'smem constant byte address 0x4 - core index']
  #allocation1 [shape = 'u32[144,128]{1,0:T(1,128)}', space=vmem, size = 0x12000, scoped, tag = 'internal scratch']
  %s0 = inlined_call_operand.vmem [shape: f32[2,8,128], index: 0, kind: input, shape index: {}]
  %s1 = inlined_call_operand.vmem [shape: f32[128,48], index: 1, kind: input, shape index: {}]
  %s2 = inlined_call_operand.hbm [shape: f32[2,8,16], index: 2, kind: output, shape index: {}]
  %s3 = sld [smem:[#allocation0]]
  $region18: #{tpu_custom_call.1} parent=0
    _
  %s5 = ssub.s32 1, %s3
  %s6 = scalar_select 0, %s5, %s3
  $region1: #{tpu_custom_call.1} parent=0
    #allocation2 [shape = 'u8[8192]{0}', space=vmem, size = 0x2000, scoped, tag = 'output window, operand 0, single buffered']
    #allocation3 [shape = 's32[1]{0}', space=sflag, size = 0x4, scoped, tag = 'scoped memory for tpu_custom_call.1']
    %7 = vsyncpa [#allocation3], 0
    // Predicated region
    $region2: #{tpu_custom_call.1} parent=1 // pred_check
      _
    $region3: #{tpu_custom_call.1} parent=1 // pred_check_branch
      %9 = sbr.rel (0) target = $region5
    $region4: #{tpu_custom_call.1} parent=1 // pred_region
      _
    $region5: #{tpu_custom_call.1} parent=1 // pred_fallthru
      _
    // Predicated region
    $region6: #{tpu_custom_call.1} parent=1 // pred_check
      _
    $region7: #{tpu_custom_call.1} parent=1 // pred_check_branch
      %11 = sbr.rel (0) target = $region9
    $region8: #{tpu_custom_call.1} parent=1 // pred_region
      _
    $region9: #{tpu_custom_call.1} parent=1 // pred_fallthru
      _
    %v12 = vld [vmem:[%s0] sm:$0xff]
    %v13 = vld [vmem:[%s0 + $0x8] sm:$0xff]
    %v14 = vld [vmem:[%s1] sm:$0xff]
    %v15 = vld [vmem:[%s1 + $0x8] sm:$0xff]
    %v16 = vld [vmem:[%s1 + $0x10] sm:$0xff]
    %v17 = vld [vmem:[%s1 + $0x18] sm:$0xff]
    %v18 = vld [vmem:[%s1 + $0x20] sm:$0xff]
    %v19 = vld [vmem:[%s1 + $0x28] sm:$0xff]
    %v20 = vld [vmem:[%s1 + $0x30] sm:$0xff]
    %v21 = vld [vmem:[%s1 + $0x38] sm:$0xff]
    %v22 = vld [vmem:[%s1 + $0x40] sm:$0xff]
    %v23 = vld [vmem:[%s1 + $0x48] sm:$0xff]
    %v24 = vld [vmem:[%s1 + $0x50] sm:$0xff]
    %v25 = vld [vmem:[%s1 + $0x58] sm:$0xff]
    %v26 = vld [vmem:[%s1 + $0x60] sm:$0xff]
    %v27 = vld [vmem:[%s1 + $0x68] sm:$0xff]
    %v28 = vld [vmem:[%s1 + $0x70] sm:$0xff]
    %v29 = vld [vmem:[%s1 + $0x78] sm:$0xff]
    %30 = vmatprep.subr.mxu0 0.0
    %31 = vmatpush1.msra.mxu0 %v14
    %32 = vmatprep.subr.mxu0 0.0
    %33 = vmatpush1.msra.mxu0 %v15
    %34 = vmatprep.subr.mxu0 0.0
    %35 = vmatpush1.msra.mxu0 %v16
    %36 = vmatprep.subr.mxu0 0.0
    %37 = vmatpush1.msra.mxu0 %v17
    %38 = vmatprep.subr.mxu0 0.0
    %39 = vmatpush1.msra.mxu0 %v18
    %40 = vmatprep.subr.mxu0 0.0
    %41 = vmatpush1.msra.mxu0 %v19
    %42 = vmatprep.subr.mxu0 0.0
    %43 = vmatpush1.msra.mxu0 %v20
    %44 = vmatprep.subr.mxu0 0.0
    %45 = vmatpush1.msra.mxu0 %v21
    %46 = vmatprep.subr.mxu0 0.0
    %47 = vmatpush1.msra.mxu0 %v22
    %48 = vmatprep.subr.mxu0 0.0
    %49 = vmatpush1.msra.mxu0 %v23
    %50 = vmatprep.subr.mxu0 0.0
    %51 = vmatpush1.msra.mxu0 %v24
    %52 = vmatprep.subr.mxu0 0.0
    %53 = vmatpush1.msra.mxu0 %v25
    %54 = vmatprep.subr.mxu0 0.0
    %55 = vmatpush1.msra.mxu0 %v26
    %56 = vmatprep.subr.mxu0 0.0
    %57 = vmatpush1.msra.mxu0 %v27
    %58 = vmatprep.subr.mxu0 0.0
    %59 = vmatpush1.msra.mxu0 %v28
    %60 = vmatprep.subr.mxu0 0.0
    %61 = vmatpush1.msra.mxu0 %v29
    %62 = vmatprep.subr.mxu0 0.0
    %63 = vmatpush1.msra.mxu0 0.0
    %64 = vmatprep.subr.mxu0 0.0
    %65 = vmatpush1.msra.mxu0 0.0
    %66 = vmatprep.subr.mxu0 0.0
    %67 = vmatpush1.msra.mxu0 0.0
    %68 = vmatprep.subr.mxu0 0.0
    %69 = vmatpush1.msra.mxu0 0.0
    %70 = vmatprep.subr.mxu0 0.0
    %71 = vmatpush1.msra.mxu0 0.0
    %72 = vmatprep.subr.mxu0 0.0
    %73 = vmatpush1.msra.mxu0 0.0
    %74 = vmatprep.subr.mxu0 0.0
    %75 = vmatpush1.msra.mxu0 0.0
    %76 = vmatprep.subr.mxu0 0.0
    %77 = vmatpush1.msra.mxu0 0.0
    %78 = vmatprep.subr.mxu0 0.0
    %79 = vmatpush1.msra.mxu0 0.0
    %80 = vmatprep.subr.mxu0 0.0
    %81 = vmatpush1.msra.mxu0 0.0
    %82 = vmatprep.subr.mxu0 0.0
    %83 = vmatpush1.msra.mxu0 0.0
    %84 = vmatprep.subr.mxu0 0.0
    %85 = vmatpush1.msra.mxu0 0.0
    %86 = vmatprep.subr.mxu0 0.0
    %87 = vmatpush1.msra.mxu0 0.0
    %88 = vmatprep.subr.mxu0 0.0
    %89 = vmatpush1.msra.mxu0 0.0
    %90 = vmatprep.subr.mxu0 0.0
    %91 = vmatpush1.msra.mxu0 0.0
    %92 = vmatprep.subr.mxu0 0.0
    %93 = vmatpush1.msra.mxu0 0.0
    %94 = vmatprep.mubr.f32.mxu0 0.0
    %95 = vmatmul.mubr.f32.gmra.mrb[0].mxu0 %v12
    %v96 = vpop.f32.mrb[0].mxu0
    %v97 = vadd.f32 0.0, %v96
    %v98 = vpop.f32.mrb[0].mxu0
    %99 = vmatprep.mubr.f32.mxu0 0.0
    %100 = vmatmul.mubr.f32.gmra.mrb[0].mxu0 %v13
    %v101 = vpop.f32.mrb[0].mxu0
    %v102 = vadd.f32 0.0, %v101
    %v103 = vpop.f32.mrb[0].mxu0
    %104 = vdwg.mxu0
    %106 = vrot.lane.b32.xlu0 %v97, 112
    %v107 = vpop.permute.xlu0 %106
    %vm108 = vcmask 130048
    %v109 = vsel %vm108, %v97, 0
    %v111 = vsel %vm108, %v107, 0
    %113 = vmatprep.subr.mxu0 0.0
    %114 = vmatpush1.xpose.msra.mxu0 %v111
    %115 = vmatprep.subr.mxu0 0.0
    %116 = vmatpush1.xpose.msra.mxu0 0.0
    %117 = vmatprep.subr.mxu0 0.0
    %118 = vmatpush1.xpose.msra.mxu0 0.0
    %119 = vmatprep.subr.mxu0 0.0
    %120 = vmatpush1.xpose.msra.mxu0 0.0
    %121 = vmatprep.subr.mxu0 0.0
    %122 = vmatpush1.xpose.msra.mxu0 0.0
    %123 = vmatprep.subr.mxu0 0.0
    %124 = vmatpush1.xpose.msra.mxu0 0.0
    %125 = vmatprep.subr.mxu0 0.0
    %126 = vmatpush1.xpose.msra.mxu0 0.0
    %127 = vmatprep.subr.mxu0 0.0
    %128 = vmatpush1.xpose.msra.mxu0 0.0
    %129 = vmatprep.subr.mxu0 0.0
    %130 = vmatpush1.xpose.msra.mxu0 0.0
    %131 = vmatprep.subr.mxu0 0.0
    %132 = vmatpush1.xpose.msra.mxu0 0.0
    %133 = vmatprep.subr.mxu0 0.0
    %134 = vmatpush1.xpose.msra.mxu0 0.0
    %135 = vmatprep.subr.mxu0 0.0
    %136 = vmatpush1.xpose.msra.mxu0 0.0
    %137 = vmatprep.subr.mxu0 0.0
    %138 = vmatpush1.xpose.msra.mxu0 0.0
    %139 = vmatprep.subr.mxu0 0.0
    %140 = vmatpush1.xpose.msra.mxu0 0.0
    %141 = vmatprep.subr.mxu0 0.0
    %142 = vmatpush1.xpose.msra.mxu0 0.0
    %143 = vmatprep.subr.mxu0 0.0
    %144 = vmatpush1.xpose.msra.mxu0 0.0
    %145 = vmatprep.subr.mxu0 0.0
    %146 = vmatpush1.xpose.msra.mxu0 0.0
    %147 = vmatprep.subr.mxu0 0.0
    %148 = vmatpush1.xpose.msra.mxu0 0.0
    %149 = vmatprep.subr.mxu0 0.0
    %150 = vmatpush1.xpose.msra.mxu0 0.0
    %151 = vmatprep.subr.mxu0 0.0
    %152 = vmatpush1.xpose.msra.mxu0 0.0
    %153 = vmatprep.subr.mxu0 0.0
    %154 = vmatpush1.xpose.msra.mxu0 0.0
    %155 = vmatprep.subr.mxu0 0.0
    %156 = vmatpush1.xpose.msra.mxu0 0.0
    %157 = vmatprep.subr.mxu0 0.0
    %158 = vmatpush1.xpose.msra.mxu0 0.0
    %159 = vmatprep.subr.mxu0 0.0
    %160 = vmatpush1.xpose.msra.mxu0 0.0
    %161 = vmatprep.subr.mxu0 0.0
    %162 = vmatpush1.xpose.msra.mxu0 0.0
    %163 = vmatprep.subr.mxu0 0.0
    %164 = vmatpush1.xpose.msra.mxu0 0.0
    %165 = vmatprep.subr.mxu0 0.0
    %166 = vmatpush1.xpose.msra.mxu0 0.0
    %167 = vmatprep.subr.mxu0 0.0
    %168 = vmatpush1.xpose.msra.mxu0 0.0
    %169 = vmatprep.subr.mxu0 0.0
    %170 = vmatpush1.xpose.msra.mxu0 0.0
    %171 = vmatprep.subr.mxu0 0.0
    %172 = vmatpush1.xpose.msra.mxu0 0.0
    %173 = vmatprep.subr.mxu0 0.0
    %174 = vmatpush1.xpose.msra.mxu0 0.0
    %175 = vmatprep.subr.mxu0 0.0
    %176 = vmatpush1.xpose.msra.mxu0 0.0
    %177 = vmatprep.mubr.f32.mxu0 0.0
    %178 = vmatmul.mubr.f32.gmra.mrb[0].mxu0 %v109
    %v179 = vpop.f32.mrb[0].mxu0
    %v180 = vadd.f32 0.0, %v179
    %v181 = vpop.f32.mrb[0].mxu0
    %182 = vdwg.mxu0
    %184 = vrot.lane.b32.xlu0 %v102, 112
    %v185 = vpop.permute.xlu0 %184
    %v186 = vsel %vm108, %v102, 0
    %v188 = vsel %vm108, %v185, 0
    %190 = vmatprep.subr.mxu0 0.0
    %191 = vmatpush1.xpose.msra.mxu0 %v188
    %192 = vmatprep.subr.mxu0 0.0
    %193 = vmatpush1.xpose.msra.mxu0 0.0
    %194 = vmatprep.subr.mxu0 0.0
    %195 = vmatpush1.xpose.msra.mxu0 0.0
    %196 = vmatprep.subr.mxu0 0.0
    %197 = vmatpush1.xpose.msra.mxu0 0.0
    %198 = vmatprep.subr.mxu0 0.0
    %199 = vmatpush1.xpose.msra.mxu0 0.0
    %200 = vmatprep.subr.mxu0 0.0
    %201 = vmatpush1.xpose.msra.mxu0 0.0
    %202 = vmatprep.subr.mxu0 0.0
    %203 = vmatpush1.xpose.msra.mxu0 0.0
    %204 = vmatprep.subr.mxu0 0.0
    %205 = vmatpush1.xpose.msra.mxu0 0.0
    %206 = vmatprep.subr.mxu0 0.0
    %207 = vmatpush1.xpose.msra.mxu0 0.0
    %208 = vmatprep.subr.mxu0 0.0
    %209 = vmatpush1.xpose.msra.mxu0 0.0
    %210 = vmatprep.subr.mxu0 0.0
    %211 = vmatpush1.xpose.msra.mxu0 0.0
    %212 = vmatprep.subr.mxu0 0.0
    %213 = vmatpush1.xpose.msra.mxu0 0.0
    %214 = vmatprep.subr.mxu0 0.0
    %215 = vmatpush1.xpose.msra.mxu0 0.0
    %216 = vmatprep.subr.mxu0 0.0
    %217 = vmatpush1.xpose.msra.mxu0 0.0
    %218 = vmatprep.subr.mxu0 0.0
    %219 = vmatpush1.xpose.msra.mxu0 0.0
    %220 = vmatprep.subr.mxu0 0.0
    %221 = vmatpush1.xpose.msra.mxu0 0.0
    %222 = vmatprep.subr.mxu0 0.0
    %223 = vmatpush1.xpose.msra.mxu0 0.0
    %224 = vmatprep.subr.mxu0 0.0
    %225 = vmatpush1.xpose.msra.mxu0 0.0
    %226 = vmatprep.subr.mxu0 0.0
    %227 = vmatpush1.xpose.msra.mxu0 0.0
    %228 = vmatprep.subr.mxu0 0.0
    %229 = vmatpush1.xpose.msra.mxu0 0.0
    %230 = vmatprep.subr.mxu0 0.0
    %231 = vmatpush1.xpose.msra.mxu0 0.0
    %232 = vmatprep.subr.mxu0 0.0
    %233 = vmatpush1.xpose.msra.mxu0 0.0
    %234 = vmatprep.subr.mxu0 0.0
    %235 = vmatpush1.xpose.msra.mxu0 0.0
    %236 = vmatprep.subr.mxu0 0.0
    %237 = vmatpush1.xpose.msra.mxu0 0.0
    %238 = vmatprep.subr.mxu0 0.0
    %239 = vmatpush1.xpose.msra.mxu0 0.0
    %240 = vmatprep.subr.mxu0 0.0
    %241 = vmatpush1.xpose.msra.mxu0 0.0
    %242 = vmatprep.subr.mxu0 0.0
    %243 = vmatpush1.xpose.msra.mxu0 0.0
    %244 = vmatprep.subr.mxu0 0.0
    %245 = vmatpush1.xpose.msra.mxu0 0.0
    %246 = vmatprep.subr.mxu0 0.0
    %247 = vmatpush1.xpose.msra.mxu0 0.0
    %248 = vmatprep.subr.mxu0 0.0
    %249 = vmatpush1.xpose.msra.mxu0 0.0
    %250 = vmatprep.subr.mxu0 0.0
    %251 = vmatpush1.xpose.msra.mxu0 0.0
    %252 = vmatprep.subr.mxu0 0.0
    %253 = vmatpush1.xpose.msra.mxu0 0.0
    %254 = vmatprep.mubr.f32.mxu0 0.0
    %255 = vmatmul.mubr.f32.gmra.mrb[0].mxu0 %v186
    %v256 = vpop.f32.mrb[0].mxu0
    %v257 = vadd.f32 0.0, %v256
    %v258 = vpop.f32.mrb[0].mxu0
    %259 = vdwg.mxu0
    %v260 = vlaneseq
    %v261 = vshrl.u32 %v260, 7
    %v262 = vlaneseq
    %v263 = vand.u32 %v262, 127
    %vm264 = vcmp.le.s32.totalorder %v263, %v261
    %v265 = vsel %vm264, 1, 0
    %vm266 = vcmp.eq.s32.totalorder %v265, 1
    %v267 = vsel %vm266, %v180, -inf
    %v268 = vsel %vm266, %v257, -inf
    %vm269 = vcmask 64512
    %v270 = vsel %vm269, %v267, -inf
    %271 = vmax.xlane.f32.xlu0 %v270
    %v272 = vpop.xlane.xlu0 %271
    %v273 = vsel %vm269, %v268, -inf
    %274 = vmax.xlane.f32.xlu0 %v273
    %v275 = vpop.xlane.xlu0 %274
    %v276 = vsub.f32 %v267, %v272
    %v277 = vsub.f32 %v268, %v275
    %v278 = vmul.f32 %v276, 1.442695
    %v279 = vpow.pop %v278
    %v280 = vmul.f32 %v277, 1.442695
    %v281 = vpow.pop %v280
    %v282 = vsel %vm269, %v279, 0.0
    %283 = vadd.xlane.f32.xlu0 %v282
    %v284 = vpop.xlane.xlu0 %283
    %v285 = vsel %vm269, %v281, 0.0
    %286 = vadd.xlane.f32.xlu0 %v285
    %v287 = vpop.xlane.xlu0 %286
    %v288 = vrcp.pop %v284
    %v289 = vmul.f32 %v279, %v288
    %v290 = vrcp.pop %v287
    %v291 = vmul.f32 %v281, %v290
    %292 = vrot.lane.b32.xlu0 %v97, 96
    %v293 = vpop.permute.xlu0 %292
    %v296 = vsel %vm269, %v289, 0
    %298 = vmatprep.subr.mxu0 0.0
    %299 = vmatpush1.msra.mxu0 %v293
    %300 = vmatprep.subr.mxu0 0.0
    %301 = vmatpush1.msra.mxu0 0.0
    %302 = vmatprep.subr.mxu0 0.0
    %303 = vmatpush1.msra.mxu0 0.0
    %304 = vmatprep.subr.mxu0 0.0
    %305 = vmatpush1.msra.mxu0 0.0
    %306 = vmatprep.subr.mxu0 0.0
    %307 = vmatpush1.msra.mxu0 0.0
    %308 = vmatprep.subr.mxu0 0.0
    %309 = vmatpush1.msra.mxu0 0.0
    %310 = vmatprep.subr.mxu0 0.0
    %311 = vmatpush1.msra.mxu0 0.0
    %312 = vmatprep.subr.mxu0 0.0
    %313 = vmatpush1.msra.mxu0 0.0
    %314 = vmatprep.subr.mxu0 0.0
    %315 = vmatpush1.msra.mxu0 0.0
    %316 = vmatprep.subr.mxu0 0.0
    %317 = vmatpush1.msra.mxu0 0.0
    %318 = vmatprep.subr.mxu0 0.0
    %319 = vmatpush1.msra.mxu0 0.0
    %320 = vmatprep.subr.mxu0 0.0
    %321 = vmatpush1.msra.mxu0 0.0
    %322 = vmatprep.subr.mxu0 0.0
    %323 = vmatpush1.msra.mxu0 0.0
    %324 = vmatprep.subr.mxu0 0.0
    %325 = vmatpush1.msra.mxu0 0.0
    %326 = vmatprep.subr.mxu0 0.0
    %327 = vmatpush1.msra.mxu0 0.0
    %328 = vmatprep.subr.mxu0 0.0
    %329 = vmatpush1.msra.mxu0 0.0
    %330 = vmatprep.subr.mxu0 0.0
    %331 = vmatpush1.msra.mxu0 0.0
    %332 = vmatprep.subr.mxu0 0.0
    %333 = vmatpush1.msra.mxu0 0.0
    %334 = vmatprep.subr.mxu0 0.0
    %335 = vmatpush1.msra.mxu0 0.0
    %336 = vmatprep.subr.mxu0 0.0
    %337 = vmatpush1.msra.mxu0 0.0
    %338 = vmatprep.subr.mxu0 0.0
    %339 = vmatpush1.msra.mxu0 0.0
    %340 = vmatprep.subr.mxu0 0.0
    %341 = vmatpush1.msra.mxu0 0.0
    %342 = vmatprep.subr.mxu0 0.0
    %343 = vmatpush1.msra.mxu0 0.0
    %344 = vmatprep.subr.mxu0 0.0
    %345 = vmatpush1.msra.mxu0 0.0
    %346 = vmatprep.subr.mxu0 0.0
    %347 = vmatpush1.msra.mxu0 0.0
    %348 = vmatprep.subr.mxu0 0.0
    %349 = vmatpush1.msra.mxu0 0.0
    %350 = vmatprep.subr.mxu0 0.0
    %351 = vmatpush1.msra.mxu0 0.0
    %352 = vmatprep.subr.mxu0 0.0
    %353 = vmatpush1.msra.mxu0 0.0
    %354 = vmatprep.subr.mxu0 0.0
    %355 = vmatpush1.msra.mxu0 0.0
    %356 = vmatprep.subr.mxu0 0.0
    %357 = vmatpush1.msra.mxu0 0.0
    %358 = vmatprep.subr.mxu0 0.0
    %359 = vmatpush1.msra.mxu0 0.0
    %360 = vmatprep.subr.mxu0 0.0
    %361 = vmatpush1.msra.mxu0 0.0
    %362 = vmatprep.mubr.f32.mxu0 0.0
    %363 = vmatmul.mubr.f32.gmra.mrb[0].mxu0 %v296
    %v364 = vpop.f32.mrb[0].mxu0
    %v365 = vadd.f32 0.0, %v364
    %v366 = vpop.f32.mrb[0].mxu0
    %367 = vdwg.mxu0
    %368 = vrot.lane.b32.xlu0 %v102, 96
    %v369 = vpop.permute.xlu0 %368
    %v372 = vsel %vm269, %v291, 0
    %374 = vmatprep.subr.mxu0 0.0
    %375 = vmatpush1.msra.mxu0 %v369
    %376 = vmatprep.subr.mxu0 0.0
    %377 = vmatpush1.msra.mxu0 0.0
    %378 = vmatprep.subr.mxu0 0.0
    %379 = vmatpush1.msra.mxu0 0.0
    %380 = vmatprep.subr.mxu0 0.0
    %381 = vmatpush1.msra.mxu0 0.0
    %382 = vmatprep.subr.mxu0 0.0
    %383 = vmatpush1.msra.mxu0 0.0
    %384 = vmatprep.subr.mxu0 0.0
    %385 = vmatpush1.msra.mxu0 0.0
    %386 = vmatprep.subr.mxu0 0.0
    %387 = vmatpush1.msra.mxu0 0.0
    %388 = vmatprep.subr.mxu0 0.0
    %389 = vmatpush1.msra.mxu0 0.0
    %390 = vmatprep.subr.mxu0 0.0
    %391 = vmatpush1.msra.mxu0 0.0
    %392 = vmatprep.subr.mxu0 0.0
    %393 = vmatpush1.msra.mxu0 0.0
    %394 = vmatprep.subr.mxu0 0.0
    %395 = vmatpush1.msra.mxu0 0.0
    %396 = vmatprep.subr.mxu0 0.0
    %397 = vmatpush1.msra.mxu0 0.0
    %398 = vmatprep.subr.mxu0 0.0
    %399 = vmatpush1.msra.mxu0 0.0
    %400 = vmatprep.subr.mxu0 0.0
    %401 = vmatpush1.msra.mxu0 0.0
    %402 = vmatprep.subr.mxu0 0.0
    %403 = vmatpush1.msra.mxu0 0.0
    %404 = vmatprep.subr.mxu0 0.0
    %405 = vmatpush1.msra.mxu0 0.0
    %406 = vmatprep.subr.mxu0 0.0
    %407 = vmatpush1.msra.mxu0 0.0
    %408 = vmatprep.subr.mxu0 0.0
    %409 = vmatpush1.msra.mxu0 0.0
    %410 = vmatprep.subr.mxu0 0.0
    %411 = vmatpush1.msra.mxu0 0.0
    %412 = vmatprep.subr.mxu0 0.0
    %413 = vmatpush1.msra.mxu0 0.0
    %414 = vmatprep.subr.mxu0 0.0
    %415 = vmatpush1.msra.mxu0 0.0
    %416 = vmatprep.subr.mxu0 0.0
    %417 = vmatpush1.msra.mxu0 0.0
    %418 = vmatprep.subr.mxu0 0.0
    %419 = vmatpush1.msra.mxu0 0.0
    %420 = vmatprep.subr.mxu0 0.0
    %421 = vmatpush1.msra.mxu0 0.0
    %422 = vmatprep.subr.mxu0 0.0
    %423 = vmatpush1.msra.mxu0 0.0
    %424 = vmatprep.subr.mxu0 0.0
    %425 = vmatpush1.msra.mxu0 0.0
    %426 = vmatprep.subr.mxu0 0.0
    %427 = vmatpush1.msra.mxu0 0.0
    %428 = vmatprep.subr.mxu0 0.0
    %429 = vmatpush1.msra.mxu0 0.0
    %430 = vmatprep.subr.mxu0 0.0
    %431 = vmatpush1.msra.mxu0 0.0
    %432 = vmatprep.subr.mxu0 0.0
    %433 = vmatpush1.msra.mxu0 0.0
    %434 = vmatprep.subr.mxu0 0.0
    %435 = vmatpush1.msra.mxu0 0.0
    %436 = vmatprep.subr.mxu0 0.0
    %437 = vmatpush1.msra.mxu0 0.0
    %438 = vmatprep.mubr.f32.mxu0 0.0
    %439 = vmatmul.mubr.f32.gmra.mrb[0].mxu0 %v372
    %v440 = vpop.f32.mrb[0].mxu0
    %v441 = vadd.f32 0.0, %v440
    %v442 = vpop.f32.mrb[0].mxu0
    %443 = vdwg.mxu0
    %444 = vst.msk [vmem:[#allocation2] sm:$0xff] %vm108, %v365
    %445 = vst.msk [vmem:[#allocation2 + $0x8] sm:$0xff] %vm108, %v441
    // Predicated region
    $region10: #{tpu_custom_call.1} parent=1 // pred_check
      _
    $region11: #{tpu_custom_call.1} parent=1 // pred_check_branch
      %447 = sbr.rel (0) target = $region13
    $region12: #{tpu_custom_call.1} parent=1 // pred_region
      %s449 = ssub.s32 256, 256
      %450 = vsyncadd [#allocation3], %s449
      %s451 = sshll.u32 [#allocation2], 4
      %s452 = int_to_ptr.vmem [resolvable:$true] %s451
      %457 = dma.vmem_to_hbm [thread:$0]  %s452, 256, %s2, [#allocation3], 128, 128, 8
    $region13: #{tpu_custom_call.1} parent=1 // pred_fallthru
      _
    // Predicated region
    $region14: #{tpu_custom_call.1} parent=1 // pred_check
      _
    $region15: #{tpu_custom_call.1} parent=1 // pred_check_branch
      %459 = sbr.rel (0) target = $region17
    $region16: #{tpu_custom_call.1} parent=1 // pred_region
      %460 = dma.done [#allocation3], 256
    $region17: #{tpu_custom_call.1} parent=1 // pred_fallthru
      _
    %461 = vsyncpa [#allocation3], 1

</llo_original>
